<compile_context>
chip_gen: v7x
topology: tpu7x:2x2x1
jax: 0.10.0
libtpu: 0.0.40
codegen_flags: <defaults>
</compile_context>

<pallas_src>
import functools

import jax
import jax.numpy as jnp
from jax import lax
from jax.experimental import pallas as pl
from jax.experimental.pallas import tpu as pltpu


def _round_up(x, m):
    return (x + m - 1) // m * m


# ------------------------------ Pallas kernel ------------------------------ #
def _fused_chain_kernel(mask_ref, p0_ref, w0_ref, *rest,
                        num_inner, ksize, pad, wpad, off_store, mpl, c_pad,
                        inv_count, eps, neg_slope):
    """Fused conv -> BN -> LeakyReLU chain with residual adds, VMEM-resident.

    Layout: activations are (C_pad, MPL) f32 where the last axis enumerates the
    spatially *padded* output grid (N, Hout+2p, Wout+2p) row-major, lane-padded
    to a multiple of 128.  `mask` marks the true interior output positions;
    everything else is kept at exactly zero so that shifted reads of the halo
    buffer implement the zero padding of the inner convolutions.
    """
    if num_inner:
        win_ref, out_ref, buf_ref = rest          # weights, output, bf16 halo buf
    else:
        (out_ref,) = rest

    mask = mask_ref[...]                          # (1, MPL) f32

    def bn_act(y):
        # BatchNorm2d(affine=False), training-mode batch stats, f32.
        s1 = jnp.sum(y * mask, axis=1, keepdims=True)          # lane (XLU) reduce
        mean = s1 * inv_count
        c = (y - mean) * mask                                   # centered, masked
        var = jnp.sum(c * c, axis=1, keepdims=True) * inv_count
        y_hat = (y - mean) * lax.rsqrt(var + eps)
        act = jnp.where(y_hat >= 0, y_hat, neg_slope * y_hat)   # LeakyReLU
        return act * mask                                       # zero halo / pad

    # ---- layer 0: strided conv as one lane-dense bf16 MXU matmul ------------
    y0 = jnp.dot(w0_ref[...], p0_ref[...], preferred_element_type=jnp.float32)
    x = bn_act(y0)                                              # (C_pad, MPL) f32

    # ---- layers 1..L-1: per-tap accumulating dots + BN + residual -----------
    if num_inner:
        buf_w = buf_ref.shape[1]
        # Zero only the halo margins (consumed as conv zero-padding); the
        # interior is fully overwritten every layer.
        if off_store > 0:
            buf_ref[:, :off_store] = jnp.zeros((c_pad, off_store), buf_ref.dtype)
        trailing = buf_w - (off_store + mpl)
        if trailing > 0:
            buf_ref[:, off_store + mpl:] = jnp.zeros((c_pad, trailing),
                                                     buf_ref.dtype)

        kk = ksize * ksize
        for l in range(num_inner):
            # Lane-aligned (off_store % 128 == 0) unmasked writeback of the
            # resident activation into the zero-padded halo buffer (bf16).
            buf_ref[:, off_store:off_store + mpl] = x.astype(buf_ref.dtype)
            y = jnp.zeros((c_pad, mpl), jnp.float32)
            for i in range(ksize):
                for j in range(ksize):
                    start = off_store + (i - pad) * wpad + (j - pad)  # static >=0
                    y = y + jnp.dot(win_ref[l * kk + i * ksize + j],
                                    buf_ref[:, start:start + mpl],
                                    preferred_element_type=jnp.float32)
            x = x + bn_act(y)                                    # residual add

    out_ref[...] = x


# ------------------------------- JAX wrapper -------------------------------- #
def residual_conv_blocks_forward(x_nchw, params, fkernel_size, kernel_size,
                                 fstride, stride, padding,
                                 *, eps=1e-5, neg_slope=0.01):
    """params: list of (weight_OIHW, bias) per conv layer.  Returns NCHW output.

    Biases are accepted for interface parity with nn.Conv2d but never used: a
    per-channel constant is cancelled exactly by the affine=False training-mode
    BatchNorm that follows every conv.
    """
    n, c_in, h, w = x_nchw.shape
    w0 = params[0][0]
    c_out = w0.shape[0]
    num_inner = len(params) - 1

    hout = (h - fkernel_size) // fstride + 1
    wout = (w - fkernel_size) // fstride + 1
    if num_inner:
        assert stride == 1 and kernel_size == 2 * padding + 1, \
            "residual layers must preserve the spatial shape"
    p = padding if num_inner else 0
    hpad, wpad = hout + 2 * p, wout + 2 * p

    m_true = n * hout * wout                 # true BN population (N*H*W)
    mp = n * hpad * wpad                     # padded-grid flat length
    mpl = _round_up(mp, 128)                 # lane-dense flat length
    c_pad = _round_up(c_out, 8)
    k0 = fkernel_size * fkernel_size * c_in
    k0p = _round_up(k0, 16)                  # bf16 sublane tile only (no 128 pad)
    off = p * wpad + p                       # max negative tap shift
    off_store = _round_up(off, 128)          # lane-aligned writeback offset
    bufw = _round_up(off_store + mpl + off, 128)

    # Layer-0 im2col (reads the raw input exactly once), embedded in the padded
    # output grid and transposed to (K, M) so the kernel output is lane-dense.
    x_nhwc = jnp.transpose(x_nchw, (0, 2, 3, 1))
    slabs = []
    for i in range(fkernel_size):
        for j in range(fkernel_size):
            slabs.append(x_nhwc[:, i:i + fstride * hout:fstride,
                                j:j + fstride * wout:fstride, :])
    pat = jnp.stack(slabs, axis=3).reshape(n, hout, wout, k0)
    pat = jnp.pad(pat, ((0, 0), (p, p), (p, p), (0, 0)))
    patT = jnp.pad(pat.reshape(mp, k0).T, ((0, k0p - k0), (0, mpl - mp)))
    patT = patT.astype(jnp.bfloat16)

    # Layer-0 weight: (C_out, C_in, kh, kw) -> (C_pad, K0p), K = (i*kw+j)*C_in+ci.
    w0T = jnp.transpose(w0, (0, 2, 3, 1)).reshape(c_out, k0)
    w0T = jnp.pad(w0T, ((0, c_pad - c_out), (0, k0p - k0))).astype(jnp.bfloat16)

    # Interior mask over the padded / lane-padded flat grid (f32, used by BN).
    mask = jnp.pad(jnp.ones((n, hout, wout), jnp.float32),
                   ((0, 0), (p, p), (p, p))).reshape(mp)
    mask = jnp.pad(mask, (0, mpl - mp)).reshape(1, mpl)

    vmem = pl.BlockSpec(memory_space=pltpu.MemorySpace.VMEM)
    inputs = [mask, patT, w0T]
    in_specs = [vmem, vmem, vmem]
    scratch_shapes = []

    if num_inner:
        # Inner-layer weights as per-tap (C_pad, C_pad) matrices,
        # index = layer*kk + tap_i*ksize + tap_j.
        wts = []
        for wi, _bi in params[1:]:
            wpadded = jnp.pad(wi, ((0, c_pad - c_out), (0, c_pad - c_out),
                                   (0, 0), (0, 0)))
            wts.append(jnp.transpose(wpadded, (2, 3, 0, 1)).reshape(
                kernel_size * kernel_size, c_pad, c_pad))
        win = jnp.concatenate(wts, axis=0).astype(jnp.bfloat16)
        inputs.append(win)
        in_specs.append(vmem)
        scratch_shapes.append(pltpu.VMEM((c_pad, bufw), jnp.bfloat16))

    # VMEM budget from the actual footprint (+2x headroom), capped at v7x size.
    vmem_bytes = sum(a.size * a.dtype.itemsize for a in inputs)
    vmem_bytes += c_pad * mpl * 4                        # f32 output
    if num_inner:
        vmem_bytes += c_pad * bufw * 2                   # bf16 halo scratch
    vmem_limit = int(min(max(2 * vmem_bytes + (1 << 20), 4 << 20), 64 << 20))

    kernel = functools.partial(
        _fused_chain_kernel, num_inner=num_inner, ksize=kernel_size, pad=p,
        wpad=wpad, off_store=off_store, mpl=mpl, c_pad=c_pad,
        inv_count=1.0 / m_true, eps=eps, neg_slope=neg_slope)

    out_flat = pl.pallas_call(
        kernel,
        out_shape=jax.ShapeDtypeStruct((c_pad, mpl), jnp.float32),
        in_specs=in_specs,
        out_specs=vmem,
        scratch_shapes=scratch_shapes,
        compiler_params=pltpu.CompilerParams(vmem_limit_bytes=vmem_limit),
    )(*inputs)

    # Decode: (C_pad, MPL) padded-flat -> interior -> NCHW.
    out = out_flat[:c_out, :mp].reshape(c_out, n, hpad, wpad)
    out = out[:, :, p:p + hout, p:p + wout]
    return jnp.transpose(out, (1, 0, 2, 3))


# --------------------------- pure-JAX reference ----------------------------- #
def _reference_forward(x_nchw, params, fkernel_size, kernel_size,
                       fstride, stride, padding, eps=1e-5, neg_slope=0.01):
    def conv(x, w, b, s, p):
        y = lax.conv_general_dilated(
            x, w, (s, s), [(p, p), (p, p)],
            dimension_numbers=("NCHW", "OIHW", "NCHW"))
        return y + b[None, :, None, None]

    def bn_act(y):
        mean = jnp.mean(y, axis=(0, 2, 3), keepdims=True)
        var = jnp.mean((y - mean) ** 2, axis=(0, 2, 3), keepdims=True)
        y = (y - mean) * lax.rsqrt(var + eps)
        return jnp.where(y >= 0, y, neg_slope * y)

    w0, b0 = params[0]
    x = bn_act(conv(x_nchw, w0, b0, fstride, 0))
    for wi, bi in params[1:]:
        x = x + bn_act(conv(x, wi, bi, stride, padding))
    return x


# --------------------------------- main ------------------------------------ #
if __name__ == "__main__":
    in_channels, out_channels = 4, 8
    fkernel_size, fstride = 4, 2            # first conv, padding=0
    kernel_size, stride, padding = 3, 1, 1  # remaining convs (shape-preserving)

    key = jax.random.PRNGKey(0)
    k_x, k_w0, k_b0, k_w1, k_b1 = jax.random.split(key, 5)

    x = jax.random.normal(k_x, (2, in_channels, 16, 16), dtype=jnp.float32)
    params = [
        (0.1 * jax.random.normal(
            k_w0, (out_channels, in_channels, fkernel_size, fkernel_size),
            jnp.float32),
         0.1 * jax.random.normal(k_b0, (out_channels,), jnp.float32)),
        (0.1 * jax.random.normal(
            k_w1, (out_channels, out_channels, kernel_size, kernel_size),
            jnp.float32),
         0.1 * jax.random.normal(k_b1, (out_channels,), jnp.float32)),
    ]

    out = residual_conv_blocks_forward(
        x, params, fkernel_size, kernel_size, fstride, stride, padding)
    out = jax.block_until_ready(out)

    ref = _reference_forward(
        x, params, fkernel_size, kernel_size, fstride, stride, padding)
    assert out.shape == ref.shape == (2, out_channels, 7, 7)
    max_err = float(jnp.max(jnp.abs(out - ref)))
    # bf16 MXU operands -> ~1e-2-scale expected rounding vs the f32 reference
    # (per review); this is quantization, not a semantics change.
    assert jnp.allclose(out, ref, rtol=4e-2, atol=4e-2), max_err

    print("KERNEL_OK")
</pallas_src>

<mosaic_0001>
module attributes {stable_mosaic.version = 11 : i64} {
  func.func @_fused_chain_kernel(%arg0: memref<1x256xf32, #tpu.memory_space<vmem>>, %arg1: memref<64x256xbf16, #tpu.memory_space<vmem>>, %arg2: memref<8x64xbf16, #tpu.memory_space<vmem>>, %arg3: memref<9x8x8xbf16, #tpu.memory_space<vmem>>, %arg4: memref<8x256xf32, #tpu.memory_space<vmem>>, %arg5: memref<8x512xbf16, #tpu.memory_space<vmem>>) attributes {dimension_semantics = [], scalar_prefetch = 0 : i64, scratch_operands = 1 : i64, tpu.core_type = #tpu.core_type<tc>} {
    %c0 = arith.constant 0 : index
    %c0_0 = arith.constant 0 : index
    %0 = vector.load %arg0[%c0, %c0_0] : memref<1x256xf32, #tpu.memory_space<vmem>>, vector<1x256xf32>
    %c0_1 = arith.constant 0 : index
    %c0_2 = arith.constant 0 : index
    %1 = vector.load %arg2[%c0_1, %c0_2] : memref<8x64xbf16, #tpu.memory_space<vmem>>, vector<8x64xbf16>
    %c0_3 = arith.constant 0 : index
    %c0_4 = arith.constant 0 : index
    %2 = vector.load %arg1[%c0_3, %c0_4] : memref<64x256xbf16, #tpu.memory_space<vmem>>, vector<64x256xbf16>
    %cst = arith.constant dense<0.000000e+00> : vector<8x256xf32>
    %3 = tpu.matmul %1, %2, %cst {dimension_numbers = #tpu.dot_dimension_numbers<[1], [0], [0], [1], [0, 0, 1, 1], [], []>} : vector<8x64xbf16>, vector<64x256xbf16>, vector<8x256xf32> -> vector<8x256xf32>
    %4 = vector.broadcast %0 : vector<1x256xf32> to vector<8x256xf32>
    %5 = arith.mulf %3, %4 : vector<8x256xf32>
    %cst_5 = arith.constant dense<0.000000e+00> : vector<8xf32>
    %6 = vector.multi_reduction <add>, %5, %cst_5 [1] : vector<8x256xf32> to vector<8xf32>
    %7 = vector.shape_cast %6 : vector<8xf32> to vector<8x1xf32>
    %cst_6 = arith.constant 0.0102040814 : f32
    %8 = vector.broadcast %cst_6 : f32 to vector<8x1xf32>
    %9 = arith.mulf %7, %8 : vector<8x1xf32>
    %10 = vector.broadcast %9 : vector<8x1xf32> to vector<8x256xf32>
    %11 = arith.subf %3, %10 : vector<8x256xf32>
    %12 = vector.broadcast %0 : vector<1x256xf32> to vector<8x256xf32>
    %13 = arith.mulf %11, %12 : vector<8x256xf32>
    %14 = arith.mulf %13, %13 : vector<8x256xf32>
    %cst_7 = arith.constant dense<0.000000e+00> : vector<8xf32>
    %15 = vector.multi_reduction <add>, %14, %cst_7 [1] : vector<8x256xf32> to vector<8xf32>
    %16 = vector.shape_cast %15 : vector<8xf32> to vector<8x1xf32>
    %cst_8 = arith.constant 0.0102040814 : f32
    %17 = vector.broadcast %cst_8 : f32 to vector<8x1xf32>
    %18 = arith.mulf %16, %17 : vector<8x1xf32>
    %19 = vector.broadcast %9 : vector<8x1xf32> to vector<8x256xf32>
    %20 = arith.subf %3, %19 : vector<8x256xf32>
    %cst_9 = arith.constant 9.99999974E-6 : f32
    %21 = vector.broadcast %cst_9 : f32 to vector<8x1xf32>
    %22 = arith.addf %18, %21 : vector<8x1xf32>
    %23 = math.rsqrt %22 : vector<8x1xf32>
    %24 = vector.broadcast %23 : vector<8x1xf32> to vector<8x256xf32>
    %25 = arith.mulf %20, %24 : vector<8x256xf32>
    %cst_10 = arith.constant 0.000000e+00 : f32
    %26 = vector.broadcast %cst_10 : f32 to vector<8x256xf32>
    %27 = arith.cmpf oge, %25, %26 : vector<8x256xf32>
    %cst_11 = arith.constant 0.00999999977 : f32
    %28 = vector.broadcast %cst_11 : f32 to vector<8x256xf32>
    %29 = arith.mulf %28, %25 : vector<8x256xf32>
    %30 = arith.select %27, %25, %29 : vector<8x256xi1>, vector<8x256xf32>
    %31 = vector.broadcast %0 : vector<1x256xf32> to vector<8x256xf32>
    %32 = arith.mulf %30, %31 : vector<8x256xf32>
    %cst_12 = arith.constant 0.000000e+00 : bf16
    %33 = vector.broadcast %cst_12 : bf16 to vector<8x128xbf16>
    %c0_13 = arith.constant 0 : index
    %c0_14 = arith.constant 0 : index
    %34 = vector.load %arg5[%c0_13, %c0_14] : memref<8x512xbf16, #tpu.memory_space<vmem>>, vector<8x128xbf16>
    tpu.vector_store %arg5[%c0_13, %c0_14], %33 {strides = array<i32>} : memref<8x512xbf16, #tpu.memory_space<vmem>>, vector<8x128xbf16>,
    %cst_15 = arith.constant 0.000000e+00 : bf16
    %35 = vector.broadcast %cst_15 : bf16 to vector<8x128xbf16>
    %c0_16 = arith.constant 0 : index
    %c384 = arith.constant 384 : index
    %36 = vector.load %arg5[%c0_16, %c384] : memref<8x512xbf16, #tpu.memory_space<vmem>>, vector<8x128xbf16>
    tpu.vector_store %arg5[%c0_16, %c384], %35 {strides = array<i32>} : memref<8x512xbf16, #tpu.memory_space<vmem>>, vector<8x128xbf16>,
    %37 = arith.truncf %32 : vector<8x256xf32> to vector<8x256xbf16>
    %c0_17 = arith.constant 0 : index
    %c128 = arith.constant 128 : index
    %38 = vector.load %arg5[%c0_17, %c128] : memref<8x512xbf16, #tpu.memory_space<vmem>>, vector<8x256xbf16>
    tpu.vector_store %arg5[%c0_17, %c128], %37 {strides = array<i32>} : memref<8x512xbf16, #tpu.memory_space<vmem>>, vector<8x256xbf16>,
    %cst_18 = arith.constant 0.000000e+00 : f32
    %39 = vector.broadcast %cst_18 : f32 to vector<8x256xf32>
    %c0_19 = arith.constant 0 : index
    %c0_20 = arith.constant 0 : index
    %c0_21 = arith.constant 0 : index
    %40 = vector.load %arg3[%c0_19, %c0_20, %c0_21] : memref<9x8x8xbf16, #tpu.memory_space<vmem>>, vector<1x8x8xbf16>
    %41 = vector.shape_cast %40 : vector<1x8x8xbf16> to vector<8x8xbf16>
    %c0_22 = arith.constant 0 : index
    %c118 = arith.constant 118 : index
    %42 = vector.load %arg5[%c0_22, %c118] : memref<8x512xbf16, #tpu.memory_space<vmem>>, vector<8x256xbf16>
    %cst_23 = arith.constant dense<0.000000e+00> : vector<8x256xf32>
    %43 = tpu.matmul %41, %42, %cst_23 {dimension_numbers = #tpu.dot_dimension_numbers<[1], [0], [0], [1], [0, 0, 1, 1], [], []>} : vector<8x8xbf16>, vector<8x256xbf16>, vector<8x256xf32> -> vector<8x256xf32>
    %44 = arith.addf %39, %43 : vector<8x256xf32>
    %c1 = arith.constant 1 : index
    %c0_24 = arith.constant 0 : index
    %c0_25 = arith.constant 0 : index
    %45 = vector.load %arg3[%c1, %c0_24, %c0_25] : memref<9x8x8xbf16, #tpu.memory_space<vmem>>, vector<1x8x8xbf16>
    %46 = vector.shape_cast %45 : vector<1x8x8xbf16> to vector<8x8xbf16>
    %c0_26 = arith.constant 0 : index
    %c119 = arith.constant 119 : index
    %47 = vector.load %arg5[%c0_26, %c119] : memref<8x512xbf16, #tpu.memory_space<vmem>>, vector<8x256xbf16>
    %cst_27 = arith.constant dense<0.000000e+00> : vector<8x256xf32>
    %48 = tpu.matmul %46, %47, %cst_27 {dimension_numbers = #tpu.dot_dimension_numbers<[1], [0], [0], [1], [0, 0, 1, 1], [], []>} : vector<8x8xbf16>, vector<8x256xbf16>, vector<8x256xf32> -> vector<8x256xf32>
    %49 = arith.addf %44, %48 : vector<8x256xf32>
    %c2 = arith.constant 2 : index
    %c0_28 = arith.constant 0 : index
    %c0_29 = arith.constant 0 : index
    %50 = vector.load %arg3[%c2, %c0_28, %c0_29] : memref<9x8x8xbf16, #tpu.memory_space<vmem>>, vector<1x8x8xbf16>
    %51 = vector.shape_cast %50 : vector<1x8x8xbf16> to vector<8x8xbf16>
    %c0_30 = arith.constant 0 : index
    %c120 = arith.constant 120 : index
    %52 = vector.load %arg5[%c0_30, %c120] : memref<8x512xbf16, #tpu.memory_space<vmem>>, vector<8x256xbf16>
    %cst_31 = arith.constant dense<0.000000e+00> : vector<8x256xf32>
    %53 = tpu.matmul %51, %52, %cst_31 {dimension_numbers = #tpu.dot_dimension_numbers<[1], [0], [0], [1], [0, 0, 1, 1], [], []>} : vector<8x8xbf16>, vector<8x256xbf16>, vector<8x256xf32> -> vector<8x256xf32>
    %54 = arith.addf %49, %53 : vector<8x256xf32>
    %c3 = arith.constant 3 : index
    %c0_32 = arith.constant 0 : index
    %c0_33 = arith.constant 0 : index
    %55 = vector.load %arg3[%c3, %c0_32, %c0_33] : memref<9x8x8xbf16, #tpu.memory_space<vmem>>, vector<1x8x8xbf16>
    %56 = vector.shape_cast %55 : vector<1x8x8xbf16> to vector<8x8xbf16>
    %c0_34 = arith.constant 0 : index
    %c127 = arith.constant 127 : index
    %57 = vector.load %arg5[%c0_34, %c127] : memref<8x512xbf16, #tpu.memory_space<vmem>>, vector<8x256xbf16>
    %cst_35 = arith.constant dense<0.000000e+00> : vector<8x256xf32>
    %58 = tpu.matmul %56, %57, %cst_35 {dimension_numbers = #tpu.dot_dimension_numbers<[1], [0], [0], [1], [0, 0, 1, 1], [], []>} : vector<8x8xbf16>, vector<8x256xbf16>, vector<8x256xf32> -> vector<8x256xf32>
    %59 = arith.addf %54, %58 : vector<8x256xf32>
    %c4 = arith.constant 4 : index
    %c0_36 = arith.constant 0 : index
    %c0_37 = arith.constant 0 : index
    %60 = vector.load %arg3[%c4, %c0_36, %c0_37] : memref<9x8x8xbf16, #tpu.memory_space<vmem>>, vector<1x8x8xbf16>
    %61 = vector.shape_cast %60 : vector<1x8x8xbf16> to vector<8x8xbf16>
    %c0_38 = arith.constant 0 : index
    %c128_39 = arith.constant 128 : index
    %62 = vector.load %arg5[%c0_38, %c128_39] : memref<8x512xbf16, #tpu.memory_space<vmem>>, vector<8x256xbf16>
    %cst_40 = arith.constant dense<0.000000e+00> : vector<8x256xf32>
    %63 = tpu.matmul %61, %62, %cst_40 {dimension_numbers = #tpu.dot_dimension_numbers<[1], [0], [0], [1], [0, 0, 1, 1], [], []>} : vector<8x8xbf16>, vector<8x256xbf16>, vector<8x256xf32> -> vector<8x256xf32>
    %64 = arith.addf %59, %63 : vector<8x256xf32>
    %c5 = arith.constant 5 : index
    %c0_41 = arith.constant 0 : index
    %c0_42 = arith.constant 0 : index
    %65 = vector.load %arg3[%c5, %c0_41, %c0_42] : memref<9x8x8xbf16, #tpu.memory_space<vmem>>, vector<1x8x8xbf16>
    %66 = vector.shape_cast %65 : vector<1x8x8xbf16> to vector<8x8xbf16>
    %c0_43 = arith.constant 0 : index
    %c129 = arith.constant 129 : index
    %67 = vector.load %arg5[%c0_43, %c129] : memref<8x512xbf16, #tpu.memory_space<vmem>>, vector<8x256xbf16>
    %cst_44 = arith.constant dense<0.000000e+00> : vector<8x256xf32>
    %68 = tpu.matmul %66, %67, %cst_44 {dimension_numbers = #tpu.dot_dimension_numbers<[1], [0], [0], [1], [0, 0, 1, 1], [], []>} : vector<8x8xbf16>, vector<8x256xbf16>, vector<8x256xf32> -> vector<8x256xf32>
    %69 = arith.addf %64, %68 : vector<8x256xf32>
    %c6 = arith.constant 6 : index
    %c0_45 = arith.constant 0 : index
    %c0_46 = arith.constant 0 : index
    %70 = vector.load %arg3[%c6, %c0_45, %c0_46] : memref<9x8x8xbf16, #tpu.memory_space<vmem>>, vector<1x8x8xbf16>
    %71 = vector.shape_cast %70 : vector<1x8x8xbf16> to vector<8x8xbf16>
    %c0_47 = arith.constant 0 : index
    %c136 = arith.constant 136 : index
    %72 = vector.load %arg5[%c0_47, %c136] : memref<8x512xbf16, #tpu.memory_space<vmem>>, vector<8x256xbf16>
    %cst_48 = arith.constant dense<0.000000e+00> : vector<8x256xf32>
    %73 = tpu.matmul %71, %72, %cst_48 {dimension_numbers = #tpu.dot_dimension_numbers<[1], [0], [0], [1], [0, 0, 1, 1], [], []>} : vector<8x8xbf16>, vector<8x256xbf16>, vector<8x256xf32> -> vector<8x256xf32>
    %74 = arith.addf %69, %73 : vector<8x256xf32>
    %c7 = arith.constant 7 : index
    %c0_49 = arith.constant 0 : index
    %c0_50 = arith.constant 0 : index
    %75 = vector.load %arg3[%c7, %c0_49, %c0_50] : memref<9x8x8xbf16, #tpu.memory_space<vmem>>, vector<1x8x8xbf16>
    %76 = vector.shape_cast %75 : vector<1x8x8xbf16> to vector<8x8xbf16>
    %c0_51 = arith.constant 0 : index
    %c137 = arith.constant 137 : index
    %77 = vector.load %arg5[%c0_51, %c137] : memref<8x512xbf16, #tpu.memory_space<vmem>>, vector<8x256xbf16>
    %cst_52 = arith.constant dense<0.000000e+00> : vector<8x256xf32>
    %78 = tpu.matmul %76, %77, %cst_52 {dimension_numbers = #tpu.dot_dimension_numbers<[1], [0], [0], [1], [0, 0, 1, 1], [], []>} : vector<8x8xbf16>, vector<8x256xbf16>, vector<8x256xf32> -> vector<8x256xf32>
    %79 = arith.addf %74, %78 : vector<8x256xf32>
    %c8 = arith.constant 8 : index
    %c0_53 = arith.constant 0 : index
    %c0_54 = arith.constant 0 : index
    %80 = vector.load %arg3[%c8, %c0_53, %c0_54] : memref<9x8x8xbf16, #tpu.memory_space<vmem>>, vector<1x8x8xbf16>
    %81 = vector.shape_cast %80 : vector<1x8x8xbf16> to vector<8x8xbf16>
    %c0_55 = arith.constant 0 : index
    %c138 = arith.constant 138 : index
    %82 = vector.load %arg5[%c0_55, %c138] : memref<8x512xbf16, #tpu.memory_space<vmem>>, vector<8x256xbf16>
    %cst_56 = arith.constant dense<0.000000e+00> : vector<8x256xf32>
    %83 = tpu.matmul %81, %82, %cst_56 {dimension_numbers = #tpu.dot_dimension_numbers<[1], [0], [0], [1], [0, 0, 1, 1], [], []>} : vector<8x8xbf16>, vector<8x256xbf16>, vector<8x256xf32> -> vector<8x256xf32>
    %84 = arith.addf %79, %83 : vector<8x256xf32>
    %85 = vector.broadcast %0 : vector<1x256xf32> to vector<8x256xf32>
    %86 = arith.mulf %84, %85 : vector<8x256xf32>
    %cst_57 = arith.constant dense<0.000000e+00> : vector<8xf32>
    %87 = vector.multi_reduction <add>, %86, %cst_57 [1] : vector<8x256xf32> to vector<8xf32>
    %88 = vector.shape_cast %87 : vector<8xf32> to vector<8x1xf32>
    %cst_58 = arith.constant 0.0102040814 : f32
    %89 = vector.broadcast %cst_58 : f32 to vector<8x1xf32>
    %90 = arith.mulf %88, %89 : vector<8x1xf32>
    %91 = vector.broadcast %90 : vector<8x1xf32> to vector<8x256xf32>
    %92 = arith.subf %84, %91 : vector<8x256xf32>
    %93 = vector.broadcast %0 : vector<1x256xf32> to vector<8x256xf32>
    %94 = arith.mulf %92, %93 : vector<8x256xf32>
    %95 = arith.mulf %94, %94 : vector<8x256xf32>
    %cst_59 = arith.constant dense<0.000000e+00> : vector<8xf32>
    %96 = vector.multi_reduction <add>, %95, %cst_59 [1] : vector<8x256xf32> to vector<8xf32>
    %97 = vector.shape_cast %96 : vector<8xf32> to vector<8x1xf32>
    %cst_60 = arith.constant 0.0102040814 : f32
    %98 = vector.broadcast %cst_60 : f32 to vector<8x1xf32>
    %99 = arith.mulf %97, %98 : vector<8x1xf32>
    %100 = vector.broadcast %90 : vector<8x1xf32> to vector<8x256xf32>
    %101 = arith.subf %84, %100 : vector<8x256xf32>
    %cst_61 = arith.constant 9.99999974E-6 : f32
    %102 = vector.broadcast %cst_61 : f32 to vector<8x1xf32>
    %103 = arith.addf %99, %102 : vector<8x1xf32>
    %104 = math.rsqrt %103 : vector<8x1xf32>
    %105 = vector.broadcast %104 : vector<8x1xf32> to vector<8x256xf32>
    %106 = arith.mulf %101, %105 : vector<8x256xf32>
    %cst_62 = arith.constant 0.000000e+00 : f32
    %107 = vector.broadcast %cst_62 : f32 to vector<8x256xf32>
    %108 = arith.cmpf oge, %106, %107 : vector<8x256xf32>
    %cst_63 = arith.constant 0.00999999977 : f32
    %109 = vector.broadcast %cst_63 : f32 to vector<8x256xf32>
    %110 = arith.mulf %109, %106 : vector<8x256xf32>
    %111 = arith.select %108, %106, %110 : vector<8x256xi1>, vector<8x256xf32>
    %112 = vector.broadcast %0 : vector<1x256xf32> to vector<8x256xf32>
    %113 = arith.mulf %111, %112 : vector<8x256xf32>
    %114 = arith.addf %32, %113 : vector<8x256xf32>
    %c0_64 = arith.constant 0 : index
    %c0_65 = arith.constant 0 : index
    %115 = vector.load %arg4[%c0_64, %c0_65] : memref<8x256xf32, #tpu.memory_space<vmem>>, vector<8x256xf32>
    tpu.vector_store %arg4[%c0_64, %c0_65], %114 {strides = array<i32>} : memref<8x256xf32, #tpu.memory_space<vmem>>, vector<8x256xf32>,
    return
  }
}

</mosaic_0001>

<llo_original>
// kernel: tpu_custom_call.1
$region0: #{tpu_custom_call.1}
  #allocation0 [shape = 'u32[]', space=smem, size = 0x4, offset = 0x4, fixed_abs, tag = 'smem constant byte address 0x4 - core index']
  #allocation1 [shape = 'u32[144,128]{1,0:T(1,128)}', space=vmem, size = 0x12000, scoped, tag = 'internal scratch']
  #allocation2 [shape = 'bf16[8,512]{1,0:T(8,128)(2,1)}', space=vmem, size = 0x2000, scoped, tag = 'scratch operand']
  %s0 = inlined_call_operand.vmem [shape: f32[1,256], index: 0, kind: input, shape index: {}]
  %s1 = inlined_call_operand.vmem [shape: bf16[64,256], index: 1, kind: input, shape index: {}]
  %s2 = inlined_call_operand.vmem [shape: bf16[8,64], index: 2, kind: input, shape index: {}]
  %s3 = inlined_call_operand.vmem [shape: bf16[9,8,8], index: 3, kind: input, shape index: {}]
  %s4 = inlined_call_operand.hbm [shape: f32[8,256], index: 4, kind: output, shape index: {}]
  %s5 = sld [smem:[#allocation0]]
  $region26: #{tpu_custom_call.1} parent=0
    _
  %s7 = ssub.s32 1, %s5
  %s8 = scalar_select 0, %s7, %s5
  $region1: #{tpu_custom_call.1} parent=0
    #allocation3 [shape = 'u8[8192]{0}', space=vmem, size = 0x2000, scoped, tag = 'output window, operand 0, single buffered']
    #allocation4 [shape = 's32[1]{0}', space=sflag, size = 0x4, scoped, tag = 'scoped memory for tpu_custom_call.1']
    %9 = vsyncpa [#allocation4], 0
    // Predicated region
    $region2: #{tpu_custom_call.1} parent=1 // pred_check
      _
    $region3: #{tpu_custom_call.1} parent=1 // pred_check_branch
      %11 = sbr.rel (0) target = $region5
    $region4: #{tpu_custom_call.1} parent=1 // pred_region
      _
    $region5: #{tpu_custom_call.1} parent=1 // pred_fallthru
      _
    // Predicated region
    $region6: #{tpu_custom_call.1} parent=1 // pred_check
      _
    $region7: #{tpu_custom_call.1} parent=1 // pred_check_branch
      %13 = sbr.rel (0) target = $region9
    $region8: #{tpu_custom_call.1} parent=1 // pred_region
      _
    $region9: #{tpu_custom_call.1} parent=1 // pred_fallthru
      _
    // Predicated region
    $region10: #{tpu_custom_call.1} parent=1 // pred_check
      _
    $region11: #{tpu_custom_call.1} parent=1 // pred_check_branch
      %15 = sbr.rel (0) target = $region13
    $region12: #{tpu_custom_call.1} parent=1 // pred_region
      _
    $region13: #{tpu_custom_call.1} parent=1 // pred_fallthru
      _
    // Predicated region
    $region14: #{tpu_custom_call.1} parent=1 // pred_check
      _
    $region15: #{tpu_custom_call.1} parent=1 // pred_check_branch
      %17 = sbr.rel (0) target = $region17
    $region16: #{tpu_custom_call.1} parent=1 // pred_region
      _
    $region17: #{tpu_custom_call.1} parent=1 // pred_fallthru
      _
    %v19 = vld [vmem:[%s0] sm:$0x3]
    %v20 = vld [vmem:[%s2] sm:$0xf]
    %v21 = vld [vmem:[%s1] sm:$0xff]
    %v22 = vld [vmem:[%s1 + $0x8] sm:$0xff]
    %v23 = vld [vmem:[%s1 + $0x10] sm:$0xff]
    %v24 = vld [vmem:[%s1 + $0x18] sm:$0xff]
    %v25 = vld [vmem:[%s1 + $0x20] sm:$0xff]
    %v26 = vld [vmem:[%s1 + $0x28] sm:$0xff]
    %v27 = vld [vmem:[%s1 + $0x30] sm:$0xff]
    %v28 = vld [vmem:[%s1 + $0x38] sm:$0xff]
    %v37 = vunpack.c.l.b16 %v21
    %v38 = vunpack.c.h.b16 %v21
    %v39 = vunpack.c.l.b16 %v22
    %v40 = vunpack.c.h.b16 %v22
    %v41 = vunpack.c.l.b16 %v23
    %v42 = vunpack.c.h.b16 %v23
    %v43 = vunpack.c.l.b16 %v24
    %v44 = vunpack.c.h.b16 %v24
    %v45 = vunpack.c.l.b16 %v25
    %v46 = vunpack.c.h.b16 %v25
    %v47 = vunpack.c.l.b16 %v26
    %v48 = vunpack.c.h.b16 %v26
    %v49 = vunpack.c.l.b16 %v27
    %v50 = vunpack.c.h.b16 %v27
    %v51 = vunpack.c.l.b16 %v28
    %v52 = vunpack.c.h.b16 %v28
    %v53 = vpack.c.b16 %v39, %v37
    %v54 = vpack.c.b16 %v40, %v38
    %v55 = vpack.c.b16 %v43, %v41
    %v56 = vpack.c.b16 %v44, %v42
    %v57 = vpack.c.b16 %v47, %v45
    %v58 = vpack.c.b16 %v48, %v46
    %v59 = vpack.c.b16 %v51, %v49
    %v60 = vpack.c.b16 %v52, %v50
    %vm69 = vcmask 523264
    %v71 = vsel %vm69, %v20, 0
    %73 = vmatprep.subr.bf16.mxu0 %v54
    %74 = vmatpush1.bf16.msra.mxu0 %v53
    %75 = vmatprep.subr.bf16.mxu0 %v56
    %76 = vmatpush1.bf16.msra.mxu0 %v55
    %77 = vmatprep.subr.bf16.mxu0 %v58
    %78 = vmatpush1.bf16.msra.mxu0 %v57
    %79 = vmatprep.subr.bf16.mxu0 %v60
    %80 = vmatpush1.bf16.msra.mxu0 %v59
    %81 = vmatprep.subr.bf16.mxu0 0
    %82 = vmatpush1.bf16.msra.mxu0 0
    %83 = vmatprep.subr.bf16.mxu0 0
    %84 = vmatpush1.bf16.msra.mxu0 0
    %85 = vmatprep.subr.bf16.mxu0 0
    %86 = vmatpush1.bf16.msra.mxu0 0
    %87 = vmatprep.subr.bf16.mxu0 0
    %88 = vmatpush1.bf16.msra.mxu0 0
    %89 = vmatprep.subr.bf16.mxu0 0
    %90 = vmatpush1.bf16.msra.mxu0 0
    %91 = vmatprep.subr.bf16.mxu0 0
    %92 = vmatpush1.bf16.msra.mxu0 0
    %93 = vmatprep.subr.bf16.mxu0 0
    %94 = vmatpush1.bf16.msra.mxu0 0
    %95 = vmatprep.subr.bf16.mxu0 0
    %96 = vmatpush1.bf16.msra.mxu0 0
    %97 = vmatprep.subr.bf16.mxu0 0
    %98 = vmatpush1.bf16.msra.mxu0 0
    %99 = vmatprep.subr.bf16.mxu0 0
    %100 = vmatpush1.bf16.msra.mxu0 0
    %101 = vmatprep.subr.bf16.mxu0 0
    %102 = vmatpush1.bf16.msra.mxu0 0
    %103 = vmatprep.subr.bf16.mxu0 0
    %104 = vmatpush1.bf16.msra.mxu0 0
    %105 = vmatprep.mubr.bf16.mxu0 0
    %106 = vmatmul.mubr.bf16.gmra.mrb[0].mxu0 %v71
    %v107 = vpop.f32.mrb[0].mxu0
    %v108 = vadd.f32 0.0, %v107
    %v109 = vpop.f32.mrb[0].mxu0
    %v110 = vadd.f32 0.0, %v109
    %v111 = vpop.f32.mrb[0].mxu0
    %v112 = vpop.f32.mrb[0].mxu0
    %113 = vdwg.mxu0
    %v115 = vlaneseq
    %v116 = vshrl.u32 %v115, 7
    %v117 = vsub.s32 0, %v116
    %v118 = vrot.slane %v19, %v117
    %v119 = vlaneseq
    %v120 = vshrl.u32 %v119, 7
    %v121 = vsub.s32 1, %v120
    %v122 = vrot.slane %v19, %v121
    %v125 = vmul.f32 %v108, %v118
    %v126 = vmul.f32 %v110, %v122
    %v127 = vadd.f32 %v125, %v126
    %128 = vadd.xlane.f32.xlu0 %v127
    %v129 = vpop.xlane.xlu0 %128
    %v130 = vmul.f32 %v129, 0.010204081
    %v131 = vsub.f32 %v108, %v130
    %v132 = vsub.f32 %v110, %v130
    %v133 = vmul.f32 %v131, %v118
    %v134 = vmul.f32 %v132, %v122
    %v135 = vmul.f32 %v133, %v133
    %v136 = vmul.f32 %v134, %v134
    %v137 = vadd.f32 %v135, %v136
    %138 = vadd.xlane.f32.xlu0 %v137
    %v139 = vpop.xlane.xlu0 %138
    %v140 = vmul.f32 %v139, 0.010204081
    %v141 = vadd.f32 %v140, 1e-05
    %v142 = vrsqrt.pop %v141
    %v143 = vmul.f32 %v131, %v142
    %v144 = vmul.f32 %v132, %v142
    %vm145 = vcmp.ge.f32.partialorder %v143, 0.0
    %vm146 = vcmp.ge.f32.partialorder %v144, 0.0
    %v147 = vmul.f32 %v143, 0.01
    %v148 = vmul.f32 %v144, 0.01
    %v149 = vsel %vm145, %v143, %v147
    %v150 = vsel %vm146, %v144, %v148
    %v151 = vmul.f32 %v149, %v118
    %v152 = vmul.f32 %v150, %v122
    %153 = vst [vmem:[#allocation2] sm:$0xf] 0
    %154 = vst [vmem:[#allocation2 + $0xc] sm:$0xf] 0
    %v155 = vpack.c.bf16 %v151, %v151
    %v156 = vpack.c.bf16 %v152, %v152
    %v159 = vunpack.c.l.b16 %v155
    %v160 = vunpack.c.l.b16 %v156
    %v161 = vpack.c.b16 %v160, %v159
    %163 = vst [vmem:[#allocation2 + $0x4] sm:$0xff] %v161
    %v164 = vld [vmem:[%s3] sm:$0xf]
    %v165 = vld [vmem:[#allocation2] sm:$0xff]
    %v166 = vld [vmem:[#allocation2 + $0x8] sm:$0xf]
    %s167 = scalar_lea.vmem %s3, 4
    %v168 = vld [vmem:[%s167] sm:$0xf]
    %v171 = vunpack.c.l.b16 %v165
    %v172 = vunpack.c.h.b16 %v165
    %v173 = vunpack.c.l.b16 %v166
    %v174 = vpack.c.b16 %v171, %v171
    %v175 = vpack.c.b16 %v172, %v172
    %v176 = vpack.c.b16 %v173, %v173
    %177 = vrot.lane.b32.xlu0 %v174, 9
    %v178 = vpop.permute.xlu0 %177
    %179 = vrot.lane.b32.xlu0 %v175, 9
    %v180 = vpop.permute.xlu0 %179
    %181 = vrot.lane.b32.xlu0 %v176, 9
    %v182 = vpop.permute.xlu0 %181
    %vm183 = vcmask 72704
    %v184 = vsel %vm183, %v178, %v180
    %v185 = vsel %vm183, %v180, %v182
    %vm186 = vcmask 64512
    %v188 = vsel %vm186, %v168, 0
    %vm190 = vcmask 1043456
    %v192 = vsel %vm190, %v184, 0
    %v195 = vsel %vm190, %v185, 0
    %197 = vmatprep.subr.bf16.mxu0 %v195
    %198 = vmatpush1.bf16.msra.mxu0 %v192
    %199 = vmatprep.subr.bf16.mxu0 0
    %200 = vmatpush1.bf16.msra.mxu0 0
    %201 = vmatprep.subr.bf16.mxu0 0
    %202 = vmatpush1.bf16.msra.mxu0 0
    %203 = vmatprep.subr.bf16.mxu0 0
    %204 = vmatpush1.bf16.msra.mxu0 0
    %205 = vmatprep.subr.bf16.mxu0 0
    %206 = vmatpush1.bf16.msra.mxu0 0
    %207 = vmatprep.subr.bf16.mxu0 0
    %208 = vmatpush1.bf16.msra.mxu0 0
    %209 = vmatprep.subr.bf16.mxu0 0
    %210 = vmatpush1.bf16.msra.mxu0 0
    %211 = vmatprep.subr.bf16.mxu0 0
    %212 = vmatpush1.bf16.msra.mxu0 0
    %213 = vmatprep.subr.bf16.mxu0 0
    %214 = vmatpush1.bf16.msra.mxu0 0
    %215 = vmatprep.subr.bf16.mxu0 0
    %216 = vmatpush1.bf16.msra.mxu0 0
    %217 = vmatprep.subr.bf16.mxu0 0
    %218 = vmatpush1.bf16.msra.mxu0 0
    %219 = vmatprep.subr.bf16.mxu0 0
    %220 = vmatpush1.bf16.msra.mxu0 0
    %221 = vmatprep.subr.bf16.mxu0 0
    %222 = vmatpush1.bf16.msra.mxu0 0
    %223 = vmatprep.subr.bf16.mxu0 0
    %224 = vmatpush1.bf16.msra.mxu0 0
    %225 = vmatprep.subr.bf16.mxu0 0
    %226 = vmatpush1.bf16.msra.mxu0 0
    %227 = vmatprep.subr.bf16.mxu0 0
    %228 = vmatpush1.bf16.msra.mxu0 0
    %229 = vmatprep.mubr.bf16.mxu0 0
    %230 = vmatmul.mubr.bf16.gmra.mrb[0].mxu0 %v188
    %v231 = vpop.f32.mrb[0].mxu0
    %v232 = vadd.f32 0.0, %v231
    %v233 = vpop.f32.mrb[0].mxu0
    %v234 = vadd.f32 0.0, %v233
    %v235 = vpop.f32.mrb[0].mxu0
    %v236 = vpop.f32.mrb[0].mxu0
    %237 = vdwg.mxu0
    %238 = vrot.lane.b32.xlu0 %v174, 10
    %v239 = vpop.permute.xlu0 %238
    %240 = vrot.lane.b32.xlu0 %v175, 10
    %v241 = vpop.permute.xlu0 %240
    %242 = vrot.lane.b32.xlu0 %v176, 10
    %v243 = vpop.permute.xlu0 %242
    %vm244 = vcmask 80896
    %v245 = vsel %vm244, %v239, %v241
    %v246 = vsel %vm244, %v241, %v243
    %v248 = vsel %vm186, %v164, 0
    %v251 = vsel %vm190, %v245, 0
    %v254 = vsel %vm190, %v246, 0
    %256 = vmatprep.subr.bf16.mxu0 %v254
    %257 = vmatpush1.bf16.msra.mxu0 %v251
    %258 = vmatprep.subr.bf16.mxu0 0
    %259 = vmatpush1.bf16.msra.mxu0 0
    %260 = vmatprep.subr.bf16.mxu0 0
    %261 = vmatpush1.bf16.msra.mxu0 0
    %262 = vmatprep.subr.bf16.mxu0 0
    %263 = vmatpush1.bf16.msra.mxu0 0
    %264 = vmatprep.subr.bf16.mxu0 0
    %265 = vmatpush1.bf16.msra.mxu0 0
    %266 = vmatprep.subr.bf16.mxu0 0
    %267 = vmatpush1.bf16.msra.mxu0 0
    %268 = vmatprep.subr.bf16.mxu0 0
    %269 = vmatpush1.bf16.msra.mxu0 0
    %270 = vmatprep.subr.bf16.mxu0 0
    %271 = vmatpush1.bf16.msra.mxu0 0
    %272 = vmatprep.subr.bf16.mxu0 0
    %273 = vmatpush1.bf16.msra.mxu0 0
    %274 = vmatprep.subr.bf16.mxu0 0
    %275 = vmatpush1.bf16.msra.mxu0 0
    %276 = vmatprep.subr.bf16.mxu0 0
    %277 = vmatpush1.bf16.msra.mxu0 0
    %278 = vmatprep.subr.bf16.mxu0 0
    %279 = vmatpush1.bf16.msra.mxu0 0
    %280 = vmatprep.subr.bf16.mxu0 0
    %281 = vmatpush1.bf16.msra.mxu0 0
    %282 = vmatprep.subr.bf16.mxu0 0
    %283 = vmatpush1.bf16.msra.mxu0 0
    %284 = vmatprep.subr.bf16.mxu0 0
    %285 = vmatpush1.bf16.msra.mxu0 0
    %286 = vmatprep.subr.bf16.mxu0 0
    %287 = vmatpush1.bf16.msra.mxu0 0
    %288 = vmatprep.mubr.bf16.mxu0 0
    %289 = vmatmul.mubr.bf16.gmra.mrb[0].mxu0 %v248
    %v290 = vpop.f32.mrb[0].mxu0
    %v291 = vadd.f32 %v232, %v290
    %v292 = vpop.f32.mrb[0].mxu0
    %v293 = vadd.f32 %v234, %v292
    %v294 = vpop.f32.mrb[0].mxu0
    %v295 = vpop.f32.mrb[0].mxu0
    %296 = vdwg.mxu0
    %s297 = scalar_lea.vmem %s3, 8
    %v298 = vld [vmem:[%s297] sm:$0xf]
    %299 = vrot.lane.b32.xlu0 %v174, 8
    %v300 = vpop.permute.xlu0 %299
    %301 = vrot.lane.b32.xlu0 %v175, 8
    %v302 = vpop.permute.xlu0 %301
    %303 = vrot.lane.b32.xlu0 %v176, 8
    %v304 = vpop.permute.xlu0 %303
    %vm305 = vcmask 64512
    %v306 = vsel %vm305, %v300, %v302
    %v307 = vsel %vm305, %v302, %v304
    %v309 = vsel %vm186, %v298, 0
    %v312 = vsel %vm190, %v306, 0
    %v315 = vsel %vm190, %v307, 0
    %317 = vmatprep.subr.bf16.mxu0 %v315
    %318 = vmatpush1.bf16.msra.mxu0 %v312
    %319 = vmatprep.subr.bf16.mxu0 0
    %320 = vmatpush1.bf16.msra.mxu0 0
    %321 = vmatprep.subr.bf16.mxu0 0
    %322 = vmatpush1.bf16.msra.mxu0 0
    %323 = vmatprep.subr.bf16.mxu0 0
    %324 = vmatpush1.bf16.msra.mxu0 0
    %325 = vmatprep.subr.bf16.mxu0 0
    %326 = vmatpush1.bf16.msra.mxu0 0
    %327 = vmatprep.subr.bf16.mxu0 0
    %328 = vmatpush1.bf16.msra.mxu0 0
    %329 = vmatprep.subr.bf16.mxu0 0
    %330 = vmatpush1.bf16.msra.mxu0 0
    %331 = vmatprep.subr.bf16.mxu0 0
    %332 = vmatpush1.bf16.msra.mxu0 0
    %333 = vmatprep.subr.bf16.mxu0 0
    %334 = vmatpush1.bf16.msra.mxu0 0
    %335 = vmatprep.subr.bf16.mxu0 0
    %336 = vmatpush1.bf16.msra.mxu0 0
    %337 = vmatprep.subr.bf16.mxu0 0
    %338 = vmatpush1.bf16.msra.mxu0 0
    %339 = vmatprep.subr.bf16.mxu0 0
    %340 = vmatpush1.bf16.msra.mxu0 0
    %341 = vmatprep.subr.bf16.mxu0 0
    %342 = vmatpush1.bf16.msra.mxu0 0
    %343 = vmatprep.subr.bf16.mxu0 0
    %344 = vmatpush1.bf16.msra.mxu0 0
    %345 = vmatprep.subr.bf16.mxu0 0
    %346 = vmatpush1.bf16.msra.mxu0 0
    %347 = vmatprep.subr.bf16.mxu0 0
    %348 = vmatpush1.bf16.msra.mxu0 0
    %349 = vmatprep.mubr.bf16.mxu0 0
    %350 = vmatmul.mubr.bf16.gmra.mrb[0].mxu0 %v309
    %v351 = vpop.f32.mrb[0].mxu0
    %v352 = vadd.f32 0.0, %v351
    %v353 = vpop.f32.mrb[0].mxu0
    %v354 = vadd.f32 0.0, %v353
    %v355 = vpop.f32.mrb[0].mxu0
    %v356 = vpop.f32.mrb[0].mxu0
    %357 = vdwg.mxu0
    %v358 = vadd.f32 %v291, %v352
    %v359 = vadd.f32 %v293, %v354
    %s360 = scalar_lea.vmem %s3, 12
    %v361 = vld [vmem:[%s360] sm:$0xf]
    %362 = vrot.lane.b32.xlu0 %v174, 1
    %v363 = vpop.permute.xlu0 %362
    %364 = vrot.lane.b32.xlu0 %v175, 1
    %v365 = vpop.permute.xlu0 %364
    %366 = vrot.lane.b32.xlu0 %v176, 1
    %v367 = vpop.permute.xlu0 %366
    %vm368 = vcmask 7168
    %v369 = vsel %vm368, %v363, %v365
    %v370 = vsel %vm368, %v365, %v367
    %v372 = vsel %vm186, %v361, 0
    %v375 = vsel %vm190, %v369, 0
    %v378 = vsel %vm190, %v370, 0
    %380 = vmatprep.subr.bf16.mxu0 %v378
    %381 = vmatpush1.bf16.msra.mxu0 %v375
    %382 = vmatprep.subr.bf16.mxu0 0
    %383 = vmatpush1.bf16.msra.mxu0 0
    %384 = vmatprep.subr.bf16.mxu0 0
    %385 = vmatpush1.bf16.msra.mxu0 0
    %386 = vmatprep.subr.bf16.mxu0 0
    %387 = vmatpush1.bf16.msra.mxu0 0
    %388 = vmatprep.subr.bf16.mxu0 0
    %389 = vmatpush1.bf16.msra.mxu0 0
    %390 = vmatprep.subr.bf16.mxu0 0
    %391 = vmatpush1.bf16.msra.mxu0 0
    %392 = vmatprep.subr.bf16.mxu0 0
    %393 = vmatpush1.bf16.msra.mxu0 0
    %394 = vmatprep.subr.bf16.mxu0 0
    %395 = vmatpush1.bf16.msra.mxu0 0
    %396 = vmatprep.subr.bf16.mxu0 0
    %397 = vmatpush1.bf16.msra.mxu0 0
    %398 = vmatprep.subr.bf16.mxu0 0
    %399 = vmatpush1.bf16.msra.mxu0 0
    %400 = vmatprep.subr.bf16.mxu0 0
    %401 = vmatpush1.bf16.msra.mxu0 0
    %402 = vmatprep.subr.bf16.mxu0 0
    %403 = vmatpush1.bf16.msra.mxu0 0
    %404 = vmatprep.subr.bf16.mxu0 0
    %405 = vmatpush1.bf16.msra.mxu0 0
    %406 = vmatprep.subr.bf16.mxu0 0
    %407 = vmatpush1.bf16.msra.mxu0 0
    %408 = vmatprep.subr.bf16.mxu0 0
    %409 = vmatpush1.bf16.msra.mxu0 0
    %410 = vmatprep.subr.bf16.mxu0 0
    %411 = vmatpush1.bf16.msra.mxu0 0
    %412 = vmatprep.mubr.bf16.mxu0 0
    %413 = vmatmul.mubr.bf16.gmra.mrb[0].mxu0 %v372
    %v414 = vpop.f32.mrb[0].mxu0
    %v415 = vadd.f32 0.0, %v414
    %v416 = vpop.f32.mrb[0].mxu0
    %v417 = vadd.f32 0.0, %v416
    %v418 = vpop.f32.mrb[0].mxu0
    %v419 = vpop.f32.mrb[0].mxu0
    %420 = vdwg.mxu0
    %v421 = vadd.f32 %v358, %v415
    %v422 = vadd.f32 %v359, %v417
    %s423 = scalar_lea.vmem %s3, 16
    %v424 = vld [vmem:[%s423] sm:$0xf]
    %v425 = vld [vmem:[#allocation2 + $0x4] sm:$0xff]
    %v427 = vunpack.c.l.b16 %v425
    %v428 = vunpack.c.h.b16 %v425
    %v429 = vpack.c.b16 %v427, %v427
    %v430 = vpack.c.b16 %v428, %v428
    %v432 = vsel %vm186, %v424, 0
    %v435 = vsel %vm190, %v429, 0
    %v438 = vsel %vm190, %v430, 0
    %440 = vmatprep.subr.bf16.mxu0 %v438
    %441 = vmatpush1.bf16.msra.mxu0 %v435
    %442 = vmatprep.subr.bf16.mxu0 0
    %443 = vmatpush1.bf16.msra.mxu0 0
    %444 = vmatprep.subr.bf16.mxu0 0
    %445 = vmatpush1.bf16.msra.mxu0 0
    %446 = vmatprep.subr.bf16.mxu0 0
    %447 = vmatpush1.bf16.msra.mxu0 0
    %448 = vmatprep.subr.bf16.mxu0 0
    %449 = vmatpush1.bf16.msra.mxu0 0
    %450 = vmatprep.subr.bf16.mxu0 0
    %451 = vmatpush1.bf16.msra.mxu0 0
    %452 = vmatprep.subr.bf16.mxu0 0
    %453 = vmatpush1.bf16.msra.mxu0 0
    %454 = vmatprep.subr.bf16.mxu0 0
    %455 = vmatpush1.bf16.msra.mxu0 0
    %456 = vmatprep.subr.bf16.mxu0 0
    %457 = vmatpush1.bf16.msra.mxu0 0
    %458 = vmatprep.subr.bf16.mxu0 0
    %459 = vmatpush1.bf16.msra.mxu0 0
    %460 = vmatprep.subr.bf16.mxu0 0
    %461 = vmatpush1.bf16.msra.mxu0 0
    %462 = vmatprep.subr.bf16.mxu0 0
    %463 = vmatpush1.bf16.msra.mxu0 0
    %464 = vmatprep.subr.bf16.mxu0 0
    %465 = vmatpush1.bf16.msra.mxu0 0
    %466 = vmatprep.subr.bf16.mxu0 0
    %467 = vmatpush1.bf16.msra.mxu0 0
    %468 = vmatprep.subr.bf16.mxu0 0
    %469 = vmatpush1.bf16.msra.mxu0 0
    %470 = vmatprep.subr.bf16.mxu0 0
    %471 = vmatpush1.bf16.msra.mxu0 0
    %472 = vmatprep.mubr.bf16.mxu0 0
    %473 = vmatmul.mubr.bf16.gmra.mrb[0].mxu0 %v432
    %v474 = vpop.f32.mrb[0].mxu0
    %v475 = vadd.f32 0.0, %v474
    %v476 = vpop.f32.mrb[0].mxu0
    %v477 = vadd.f32 0.0, %v476
    %v478 = vpop.f32.mrb[0].mxu0
    %v479 = vpop.f32.mrb[0].mxu0
    %480 = vdwg.mxu0
    %v481 = vadd.f32 %v421, %v475
    %v482 = vadd.f32 %v422, %v477
    %s483 = scalar_lea.vmem %s3, 20
    %v484 = vld [vmem:[%s483] sm:$0xf]
    %v485 = vld [vmem:[#allocation2 + $0x4] sm:$0xff]
    %v486 = vld [vmem:[#allocation2 + $0xc] sm:$0xf]
    %v489 = vunpack.c.l.b16 %v485
    %v490 = vunpack.c.h.b16 %v485
    %v491 = vunpack.c.l.b16 %v486
    %v492 = vpack.c.b16 %v489, %v489
    %v493 = vpack.c.b16 %v490, %v490
    %v494 = vpack.c.b16 %v491, %v491
    %495 = vrot.lane.b32.xlu0 %v492, 127
    %v496 = vpop.permute.xlu0 %495
    %497 = vrot.lane.b32.xlu0 %v493, 127
    %v498 = vpop.permute.xlu0 %497
    %499 = vrot.lane.b32.xlu0 %v494, 127
    %v500 = vpop.permute.xlu0 %499
    %vm501 = vcmask 1039360
    %v502 = vsel %vm501, %v496, %v498
    %v503 = vsel %vm501, %v498, %v500
    %v505 = vsel %vm186, %v484, 0
    %v508 = vsel %vm190, %v502, 0
    %v511 = vsel %vm190, %v503, 0
    %513 = vmatprep.subr.bf16.mxu0 %v511
    %514 = vmatpush1.bf16.msra.mxu0 %v508
    %515 = vmatprep.subr.bf16.mxu0 0
    %516 = vmatpush1.bf16.msra.mxu0 0
    %517 = vmatprep.subr.bf16.mxu0 0
    %518 = vmatpush1.bf16.msra.mxu0 0
    %519 = vmatprep.subr.bf16.mxu0 0
    %520 = vmatpush1.bf16.msra.mxu0 0
    %521 = vmatprep.subr.bf16.mxu0 0
    %522 = vmatpush1.bf16.msra.mxu0 0
    %523 = vmatprep.subr.bf16.mxu0 0
    %524 = vmatpush1.bf16.msra.mxu0 0
    %525 = vmatprep.subr.bf16.mxu0 0
    %526 = vmatpush1.bf16.msra.mxu0 0
    %527 = vmatprep.subr.bf16.mxu0 0
    %528 = vmatpush1.bf16.msra.mxu0 0
    %529 = vmatprep.subr.bf16.mxu0 0
    %530 = vmatpush1.bf16.msra.mxu0 0
    %531 = vmatprep.subr.bf16.mxu0 0
    %532 = vmatpush1.bf16.msra.mxu0 0
    %533 = vmatprep.subr.bf16.mxu0 0
    %534 = vmatpush1.bf16.msra.mxu0 0
    %535 = vmatprep.subr.bf16.mxu0 0
    %536 = vmatpush1.bf16.msra.mxu0 0
    %537 = vmatprep.subr.bf16.mxu0 0
    %538 = vmatpush1.bf16.msra.mxu0 0
    %539 = vmatprep.subr.bf16.mxu0 0
    %540 = vmatpush1.bf16.msra.mxu0 0
    %541 = vmatprep.subr.bf16.mxu0 0
    %542 = vmatpush1.bf16.msra.mxu0 0
    %543 = vmatprep.subr.bf16.mxu0 0
    %544 = vmatpush1.bf16.msra.mxu0 0
    %545 = vmatprep.mubr.bf16.mxu0 0
    %546 = vmatmul.mubr.bf16.gmra.mrb[0].mxu0 %v505
    %v547 = vpop.f32.mrb[0].mxu0
    %v548 = vadd.f32 0.0, %v547
    %v549 = vpop.f32.mrb[0].mxu0
    %v550 = vadd.f32 0.0, %v549
    %v551 = vpop.f32.mrb[0].mxu0
    %v552 = vpop.f32.mrb[0].mxu0
    %553 = vdwg.mxu0
    %v554 = vadd.f32 %v481, %v548
    %v555 = vadd.f32 %v482, %v550
    %s556 = scalar_lea.vmem %s3, 24
    %v557 = vld [vmem:[%s556] sm:$0xf]
    %558 = vrot.lane.b32.xlu0 %v492, 120
    %v559 = vpop.permute.xlu0 %558
    %560 = vrot.lane.b32.xlu0 %v493, 120
    %v561 = vpop.permute.xlu0 %560
    %562 = vrot.lane.b32.xlu0 %v494, 120
    %v563 = vpop.permute.xlu0 %562
    %vm564 = vcmask 982016
    %v565 = vsel %vm564, %v559, %v561
    %v566 = vsel %vm564, %v561, %v563
    %v568 = vsel %vm186, %v557, 0
    %v571 = vsel %vm190, %v565, 0
    %v574 = vsel %vm190, %v566, 0
    %576 = vmatprep.subr.bf16.mxu0 %v574
    %577 = vmatpush1.bf16.msra.mxu0 %v571
    %578 = vmatprep.subr.bf16.mxu0 0
    %579 = vmatpush1.bf16.msra.mxu0 0
    %580 = vmatprep.subr.bf16.mxu0 0
    %581 = vmatpush1.bf16.msra.mxu0 0
    %582 = vmatprep.subr.bf16.mxu0 0
    %583 = vmatpush1.bf16.msra.mxu0 0
    %584 = vmatprep.subr.bf16.mxu0 0
    %585 = vmatpush1.bf16.msra.mxu0 0
    %586 = vmatprep.subr.bf16.mxu0 0
    %587 = vmatpush1.bf16.msra.mxu0 0
    %588 = vmatprep.subr.bf16.mxu0 0
    %589 = vmatpush1.bf16.msra.mxu0 0
    %590 = vmatprep.subr.bf16.mxu0 0
    %591 = vmatpush1.bf16.msra.mxu0 0
    %592 = vmatprep.subr.bf16.mxu0 0
    %593 = vmatpush1.bf16.msra.mxu0 0
    %594 = vmatprep.subr.bf16.mxu0 0
    %595 = vmatpush1.bf16.msra.mxu0 0
    %596 = vmatprep.subr.bf16.mxu0 0
    %597 = vmatpush1.bf16.msra.mxu0 0
    %598 = vmatprep.subr.bf16.mxu0 0
    %599 = vmatpush1.bf16.msra.mxu0 0
    %600 = vmatprep.subr.bf16.mxu0 0
    %601 = vmatpush1.bf16.msra.mxu0 0
    %602 = vmatprep.subr.bf16.mxu0 0
    %603 = vmatpush1.bf16.msra.mxu0 0
    %604 = vmatprep.subr.bf16.mxu0 0
    %605 = vmatpush1.bf16.msra.mxu0 0
    %606 = vmatprep.subr.bf16.mxu0 0
    %607 = vmatpush1.bf16.msra.mxu0 0
    %608 = vmatprep.mubr.bf16.mxu0 0
    %609 = vmatmul.mubr.bf16.gmra.mrb[0].mxu0 %v568
    %v610 = vpop.f32.mrb[0].mxu0
    %v611 = vadd.f32 0.0, %v610
    %v612 = vpop.f32.mrb[0].mxu0
    %v613 = vadd.f32 0.0, %v612
    %v614 = vpop.f32.mrb[0].mxu0
    %v615 = vpop.f32.mrb[0].mxu0
    %616 = vdwg.mxu0
    %v617 = vadd.f32 %v554, %v611
    %v618 = vadd.f32 %v555, %v613
    %s619 = scalar_lea.vmem %s3, 28
    %v620 = vld [vmem:[%s619] sm:$0xf]
    %621 = vrot.lane.b32.xlu0 %v492, 119
    %v622 = vpop.permute.xlu0 %621
    %623 = vrot.lane.b32.xlu0 %v493, 119
    %v624 = vpop.permute.xlu0 %623
    %625 = vrot.lane.b32.xlu0 %v494, 119
    %v626 = vpop.permute.xlu0 %625
    %vm627 = vcmask 973824
    %v628 = vsel %vm627, %v622, %v624
    %v629 = vsel %vm627, %v624, %v626
    %v631 = vsel %vm186, %v620, 0
    %v634 = vsel %vm190, %v628, 0
    %v637 = vsel %vm190, %v629, 0
    %639 = vmatprep.subr.bf16.mxu0 %v637
    %640 = vmatpush1.bf16.msra.mxu0 %v634
    %641 = vmatprep.subr.bf16.mxu0 0
    %642 = vmatpush1.bf16.msra.mxu0 0
    %643 = vmatprep.subr.bf16.mxu0 0
    %644 = vmatpush1.bf16.msra.mxu0 0
    %645 = vmatprep.subr.bf16.mxu0 0
    %646 = vmatpush1.bf16.msra.mxu0 0
    %647 = vmatprep.subr.bf16.mxu0 0
    %648 = vmatpush1.bf16.msra.mxu0 0
    %649 = vmatprep.subr.bf16.mxu0 0
    %650 = vmatpush1.bf16.msra.mxu0 0
    %651 = vmatprep.subr.bf16.mxu0 0
    %652 = vmatpush1.bf16.msra.mxu0 0
    %653 = vmatprep.subr.bf16.mxu0 0
    %654 = vmatpush1.bf16.msra.mxu0 0
    %655 = vmatprep.subr.bf16.mxu0 0
    %656 = vmatpush1.bf16.msra.mxu0 0
    %657 = vmatprep.subr.bf16.mxu0 0
    %658 = vmatpush1.bf16.msra.mxu0 0
    %659 = vmatprep.subr.bf16.mxu0 0
    %660 = vmatpush1.bf16.msra.mxu0 0
    %661 = vmatprep.subr.bf16.mxu0 0
    %662 = vmatpush1.bf16.msra.mxu0 0
    %663 = vmatprep.subr.bf16.mxu0 0
    %664 = vmatpush1.bf16.msra.mxu0 0
    %665 = vmatprep.subr.bf16.mxu0 0
    %666 = vmatpush1.bf16.msra.mxu0 0
    %667 = vmatprep.subr.bf16.mxu0 0
    %668 = vmatpush1.bf16.msra.mxu0 0
    %669 = vmatprep.subr.bf16.mxu0 0
    %670 = vmatpush1.bf16.msra.mxu0 0
    %671 = vmatprep.mubr.bf16.mxu0 0
    %672 = vmatmul.mubr.bf16.gmra.mrb[0].mxu0 %v631
    %v673 = vpop.f32.mrb[0].mxu0
    %v674 = vadd.f32 0.0, %v673
    %v675 = vpop.f32.mrb[0].mxu0
    %v676 = vadd.f32 0.0, %v675
    %v677 = vpop.f32.mrb[0].mxu0
    %v678 = vpop.f32.mrb[0].mxu0
    %679 = vdwg.mxu0
    %v680 = vadd.f32 %v617, %v674
    %v681 = vadd.f32 %v618, %v676
    %s682 = scalar_lea.vmem %s3, 32
    %v683 = vld [vmem:[%s682] sm:$0xf]
    %684 = vrot.lane.b32.xlu0 %v492, 118
    %v685 = vpop.permute.xlu0 %684
    %686 = vrot.lane.b32.xlu0 %v493, 118
    %v687 = vpop.permute.xlu0 %686
    %688 = vrot.lane.b32.xlu0 %v494, 118
    %v689 = vpop.permute.xlu0 %688
    %vm690 = vcmask 965632
    %v691 = vsel %vm690, %v685, %v687
    %v692 = vsel %vm690, %v687, %v689
    %v694 = vsel %vm186, %v683, 0
    %v697 = vsel %vm190, %v691, 0
    %v700 = vsel %vm190, %v692, 0
    %702 = vmatprep.subr.bf16.mxu0 %v700
    %703 = vmatpush1.bf16.msra.mxu0 %v697
    %704 = vmatprep.subr.bf16.mxu0 0
    %705 = vmatpush1.bf16.msra.mxu0 0
    %706 = vmatprep.subr.bf16.mxu0 0
    %707 = vmatpush1.bf16.msra.mxu0 0
    %708 = vmatprep.subr.bf16.mxu0 0
    %709 = vmatpush1.bf16.msra.mxu0 0
    %710 = vmatprep.subr.bf16.mxu0 0
    %711 = vmatpush1.bf16.msra.mxu0 0
    %712 = vmatprep.subr.bf16.mxu0 0
    %713 = vmatpush1.bf16.msra.mxu0 0
    %714 = vmatprep.subr.bf16.mxu0 0
    %715 = vmatpush1.bf16.msra.mxu0 0
    %716 = vmatprep.subr.bf16.mxu0 0
    %717 = vmatpush1.bf16.msra.mxu0 0
    %718 = vmatprep.subr.bf16.mxu0 0
    %719 = vmatpush1.bf16.msra.mxu0 0
    %720 = vmatprep.subr.bf16.mxu0 0
    %721 = vmatpush1.bf16.msra.mxu0 0
    %722 = vmatprep.subr.bf16.mxu0 0
    %723 = vmatpush1.bf16.msra.mxu0 0
    %724 = vmatprep.subr.bf16.mxu0 0
    %725 = vmatpush1.bf16.msra.mxu0 0
    %726 = vmatprep.subr.bf16.mxu0 0
    %727 = vmatpush1.bf16.msra.mxu0 0
    %728 = vmatprep.subr.bf16.mxu0 0
    %729 = vmatpush1.bf16.msra.mxu0 0
    %730 = vmatprep.subr.bf16.mxu0 0
    %731 = vmatpush1.bf16.msra.mxu0 0
    %732 = vmatprep.subr.bf16.mxu0 0
    %733 = vmatpush1.bf16.msra.mxu0 0
    %734 = vmatprep.mubr.bf16.mxu0 0
    %735 = vmatmul.mubr.bf16.gmra.mrb[0].mxu0 %v694
    %v736 = vpop.f32.mrb[0].mxu0
    %v737 = vadd.f32 0.0, %v736
    %v738 = vpop.f32.mrb[0].mxu0
    %v739 = vadd.f32 0.0, %v738
    %v740 = vpop.f32.mrb[0].mxu0
    %v741 = vpop.f32.mrb[0].mxu0
    %742 = vdwg.mxu0
    %v743 = vadd.f32 %v680, %v737
    %v744 = vadd.f32 %v681, %v739
    %v745 = vmul.f32 %v743, %v118
    %v746 = vmul.f32 %v744, %v122
    %v747 = vadd.f32 %v745, %v746
    %748 = vadd.xlane.f32.xlu0 %v747
    %v749 = vpop.xlane.xlu0 %748
    %v750 = vmul.f32 %v749, 0.010204081
    %v751 = vsub.f32 %v743, %v750
    %v752 = vsub.f32 %v744, %v750
    %v753 = vmul.f32 %v751, %v118
    %v754 = vmul.f32 %v752, %v122
    %v755 = vmul.f32 %v753, %v753
    %v756 = vmul.f32 %v754, %v754
    %v757 = vadd.f32 %v755, %v756
    %758 = vadd.xlane.f32.xlu0 %v757
    %v759 = vpop.xlane.xlu0 %758
    %v760 = vmul.f32 %v759, 0.010204081
    %v761 = vadd.f32 %v760, 1e-05
    %v762 = vrsqrt.pop %v761
    %v763 = vmul.f32 %v751, %v762
    %v764 = vmul.f32 %v752, %v762
    %vm765 = vcmp.ge.f32.partialorder %v763, 0.0
    %vm766 = vcmp.ge.f32.partialorder %v764, 0.0
    %v767 = vmul.f32 %v763, 0.01
    %v768 = vmul.f32 %v764, 0.01
    %v769 = vsel %vm765, %v763, %v767
    %v770 = vsel %vm766, %v764, %v768
    %v771 = vmul.f32 %v769, %v118
    %v772 = vmul.f32 %v770, %v122
    %v773 = vadd.f32 %v151, %v771
    %v774 = vadd.f32 %v152, %v772
    %775 = vst [vmem:[#allocation3] sm:$0xff] %v773
    %776 = vst [vmem:[#allocation3 + $0x8] sm:$0xff] %v774
    // Predicated region
    $region18: #{tpu_custom_call.1} parent=1 // pred_check
      _
    $region19: #{tpu_custom_call.1} parent=1 // pred_check_branch
      %778 = sbr.rel (0) target = $region21
    $region20: #{tpu_custom_call.1} parent=1 // pred_region
      %s780 = ssub.s32 256, 256
      %781 = vsyncadd [#allocation4], %s780
      %s783 = sshll.u32 [#allocation3], 4
      %s784 = int_to_ptr.vmem [resolvable:$true] %s783
      %786 = dma.vmem_to_hbm [thread:$0]  %s784, 256, %s4, [#allocation4]
    $region21: #{tpu_custom_call.1} parent=1 // pred_fallthru
      _
    // Predicated region
    $region22: #{tpu_custom_call.1} parent=1 // pred_check
      _
    $region23: #{tpu_custom_call.1} parent=1 // pred_check_branch
      %788 = sbr.rel (0) target = $region25
    $region24: #{tpu_custom_call.1} parent=1 // pred_region
      %789 = dma.done [#allocation4], 256
    $region25: #{tpu_custom_call.1} parent=1 // pred_fallthru
      _
    %790 = vsyncpa [#allocation4], 1

</llo_original>
